<compile_context>
chip_gen: v5e
topology: v5e:2x2
jax: 0.10.0
libtpu: 0.0.40
codegen_flags: <defaults>
</compile_context>

<pallas_src>
import jax
import jax.numpy as jnp
from jax import lax
from jax.experimental import pallas as pl
from jax.experimental.pallas import tpu as pltpu


def _exp_node_kernel(x_ref, d_ref, scale_ref, bias_ref, o_ref):
    # x_ref: (bb, D) native dtype; d_ref: (1, D) = rate * direction.
    x = x_ref[...]
    d = d_ref[...]
    if x.dtype != d.dtype:            # static (trace-time) dtype check
        x = x.astype(d.dtype)
    # Full-f32 MXU passes for f32 operands; bf16 operands already accumulate
    # in f32 with preferred_element_type.
    prec = lax.Precision.HIGHEST if x.dtype == jnp.float32 else None
    # (1, D) . (bb, D) contracting D  ->  (1, bb) lane-dense projection.
    proj = lax.dot_general(
        d, x,
        dimension_numbers=(((1,), (1,)), ((), ())),
        preferred_element_type=jnp.float32,
        precision=prec)
    scale = scale_ref[0, 0]
    bias = bias_ref[0, 0]             # bias = rate * shift
    o_ref[...] = (scale * jnp.exp(proj - bias)).astype(o_ref.dtype)


def exponential_function_node(x, direction, rate, shift, scale, *, block_b=8192):
    """x: [B, D] (float dtype), direction: [D], rate/shift/scale scalars.

    Returns [B, 1] float32, matching
    (scale * exp(rate * (x @ direction - shift))).unsqueeze(-1).
    """
    B, D = x.shape

    # Fold rate into the direction vector and rate*shift into one SMEM scalar.
    d_dtype = x.dtype if jnp.issubdtype(x.dtype, jnp.floating) else jnp.float32
    d_row = (jnp.asarray(direction, jnp.float32) * jnp.float32(rate)
             ).astype(d_dtype).reshape(1, D)
    bias_a = (jnp.asarray(rate, jnp.float32) *
              jnp.asarray(shift, jnp.float32)).reshape(1, 1)
    scale_a = jnp.asarray(scale, jnp.float32).reshape(1, 1)

    # Row block: either the whole batch (full-extent block, no (8,128)
    # constraint, single grid step) or a large multiple of 128 so the
    # (1, bb) output block is exactly lane-dense and the x block satisfies
    # sublane packing for f32/bf16/int8 alike.
    if B <= int(block_b):
        bb = B
    else:
        bb = max(128, (int(block_b) // 128) * 128)
    nb = pl.cdiv(B, bb)   # ragged last block handled by Pallas masking

    out = pl.pallas_call(
        _exp_node_kernel,
        out_shape=jax.ShapeDtypeStruct((1, B), jnp.float32),
        grid_spec=pltpu.PrefetchScalarGridSpec(
            num_scalar_prefetch=0,
            grid=(nb,),
            in_specs=[
                pl.BlockSpec((bb, D), lambda i: (i, 0)),             # x tile
                pl.BlockSpec((1, D), lambda i: (0, 0)),              # rate*direction
                pl.BlockSpec(memory_space=pltpu.MemorySpace.SMEM),   # scale
                pl.BlockSpec(memory_space=pltpu.MemorySpace.SMEM),   # rate*shift
            ],
            out_specs=pl.BlockSpec((1, bb), lambda i: (0, i)),       # lane-dense out
        ),
        compiler_params=pltpu.CompilerParams(
            dimension_semantics=("parallel",),
        ),
    )(x, d_row, scale_a, bias_a)

    return out.reshape(B, 1)


if __name__ == "__main__":
    key = jax.random.PRNGKey(0)
    kx, kd = jax.random.split(key)

    B, D = 16, 32  # small batch, input_dim=32
    x = jax.random.normal(kx, (B, D), dtype=jnp.float32)

    # deterministic synthetic parameters
    direction = jax.random.normal(kd, (D,), dtype=jnp.float32)
    rate, shift, scale = 0.5, 0.1, 2.0

    out = jax.block_until_ready(
        exponential_function_node(x, direction, rate, shift, scale))
    proj = jnp.sum(x * direction[None, :], axis=-1)          # full-f32 reference
    ref = (scale * jnp.exp(rate * (proj - shift)))[:, None]
    assert out.shape == (B, 1)
    assert jnp.allclose(out, ref, rtol=1e-4, atol=1e-5)

    # exercise the multi-block grid + ragged last block (no padding copy)
    B2 = 300
    x2 = jax.random.normal(jax.random.PRNGKey(1), (B2, D), dtype=jnp.float32)
    out2 = jax.block_until_ready(
        exponential_function_node(x2, direction, rate, shift, scale, block_b=128))
    proj2 = jnp.sum(x2 * direction[None, :], axis=-1)
    ref2 = (scale * jnp.exp(rate * (proj2 - shift)))[:, None]
    assert out2.shape == (B2, 1)
    assert jnp.allclose(out2, ref2, rtol=1e-4, atol=1e-5)

    print("KERNEL_OK")
</pallas_src>

<mosaic_0001>
module attributes {stable_mosaic.version = 11 : i64} {
  func.func @_exp_node_kernel(%arg0: i32, %arg1: memref<16x32xf32, #tpu.memory_space<vmem>>, %arg2: memref<1x32xf32, #tpu.memory_space<vmem>>, %arg3: memref<1x1xf32, #tpu.memory_space<smem>>, %arg4: memref<1x1xf32, #tpu.memory_space<smem>>, %arg5: memref<1x16xf32, #tpu.memory_space<vmem>>) attributes {dimension_semantics = [#tpu.dimension_semantics<parallel>], iteration_bounds = array<i64: 1>, scalar_prefetch = 0 : i64, scratch_operands = 0 : i64, tpu.core_type = #tpu.core_type<tc>, window_params = [{transform_indices = @transform_0, window_bounds = array<i64: 16, 32>}, {pipeline_mode = #tpu.pipeline_mode<synchronous>, transform_indices = @transform_1, window_bounds = array<i64: 1, 32>}, {transform_indices = @transform_2, window_bounds = array<i64: 1, 1>}, {transform_indices = @transform_3, window_bounds = array<i64: 1, 1>}, {transform_indices = @transform_4, window_bounds = array<i64: 1, 16>}]} {
    %c0 = arith.constant 0 : index
    %c0_0 = arith.constant 0 : index
    %0 = vector.load %arg1[%c0, %c0_0] : memref<16x32xf32, #tpu.memory_space<vmem>>, vector<16x32xf32>
    %c0_1 = arith.constant 0 : index
    %c0_2 = arith.constant 0 : index
    %1 = vector.load %arg2[%c0_1, %c0_2] : memref<1x32xf32, #tpu.memory_space<vmem>>, vector<1x32xf32>
    %cst = arith.constant dense<0.000000e+00> : vector<1x16xf32>
    %2 = tpu.matmul %1, %0, %cst {dimension_numbers = #tpu.dot_dimension_numbers<[1], [1], [0], [0], [0, 0, 1, 0], [], []>, precision = #tpu.contract_precision<fp32>} : vector<1x32xf32>, vector<16x32xf32>, vector<1x16xf32> -> vector<1x16xf32>
    %c0_3 = arith.constant 0 : index
    %c0_4 = arith.constant 0 : index
    %3 = memref.load %arg3[%c0_3, %c0_4] : memref<1x1xf32, #tpu.memory_space<smem>>
    %c0_5 = arith.constant 0 : index
    %c0_6 = arith.constant 0 : index
    %4 = memref.load %arg4[%c0_5, %c0_6] : memref<1x1xf32, #tpu.memory_space<smem>>
    %5 = vector.broadcast %4 : f32 to vector<1x16xf32>
    %6 = arith.subf %2, %5 : vector<1x16xf32>
    %7 = math.exp %6 : vector<1x16xf32>
    %8 = vector.broadcast %3 : f32 to vector<1x16xf32>
    %9 = arith.mulf %8, %7 : vector<1x16xf32>
    %c0_7 = arith.constant 0 : index
    %c0_8 = arith.constant 0 : index
    %10 = vector.load %arg5[%c0_7, %c0_8] : memref<1x16xf32, #tpu.memory_space<vmem>>, vector<1x16xf32>
    tpu.vector_store %arg5[%c0_7, %c0_8], %9 {strides = array<i32>} : memref<1x16xf32, #tpu.memory_space<vmem>>, vector<1x16xf32>,
    return
  }
  func.func @transform_0(%arg0: i32) -> (i32, i32) {
    %c0_i32 = arith.constant 0 : i32
    %c0_i32_0 = arith.constant 0 : i32
    return %arg0, %c0_i32 : i32, i32
  }
  func.func @transform_1(%arg0: i32) -> (i32, i32) {
    %c0_i32 = arith.constant 0 : i32
    %c0_i32_0 = arith.constant 0 : i32
    %c0_i32_1 = arith.constant 0 : i32
    return %c0_i32, %c0_i32_0 : i32, i32
  }
  func.func @transform_2(%arg0: i32) -> (i32, i32) {
    %c0_i32 = arith.constant 0 : i32
    %c0_i32_0 = arith.constant 0 : i32
    %c0_i32_1 = arith.constant 0 : i32
    return %c0_i32, %c0_i32_0 : i32, i32
  }
  func.func @transform_3(%arg0: i32) -> (i32, i32) {
    %c0_i32 = arith.constant 0 : i32
    %c0_i32_0 = arith.constant 0 : i32
    %c0_i32_1 = arith.constant 0 : i32
    return %c0_i32, %c0_i32_0 : i32, i32
  }
  func.func @transform_4(%arg0: i32) -> (i32, i32) {
    %c0_i32 = arith.constant 0 : i32
    %c0_i32_0 = arith.constant 0 : i32
    return %c0_i32, %arg0 : i32, i32
  }
}

</mosaic_0001>

<llo_original>
// kernel: tpu_custom_call.1
$region0: #{tpu_custom_call.1}
  #allocation0 [shape = 'u32[]', space=smem, size = 0x4, offset = 0x4, fixed_abs, tag = 'smem constant byte address 0x4 - core index']
  #allocation1 [shape = 'u32[72,128]{1,0:T(1,128)}', space=vmem, size = 0x9000, scoped, tag = 'internal scratch']
  #allocation2 [shape = 'f32[1,1]{1,0:T(1,128)S(6)}', space=smem, size = 0x200, scoped, tag = 'scoped memory for tpu_custom_call.1']
  #allocation3 [shape = 'f32[1,1]{1,0:T(1,128)S(6)}', space=smem, size = 0x200, scoped, tag = 'scoped memory for tpu_custom_call.1']
  %s0 = inlined_call_operand.hbm [shape: f32[16,32], index: 0, kind: input, shape index: {}]
  %s1 = inlined_call_operand.vmem [shape: f32[1,32], index: 1, kind: input, shape index: {}]
  %s2 = inlined_call_operand.<no memory space> [shape: f32[1,1], index: 2, kind: input, shape index: {}]
  %s3 = inlined_call_operand.<no memory space> [shape: f32[1,1], index: 3, kind: input, shape index: {}]
  %s4 = inlined_call_operand.hbm [shape: f32[1,16], index: 4, kind: output, shape index: {}]
  %s5 = sld [smem:[#allocation0]]
  $region30: #{tpu_custom_call.1} parent=0
    _
  %s7 = ssub.s32 1, %s5
  %s8 = scalar_select 0, %s7, %s5
  %9 = sst [smem:[#allocation2]] %s2
  %10 = sst [smem:[#allocation3]] %s3
  $region1: #{tpu_custom_call.1} parent=0
    #allocation4 [shape = 'u8[8192]{0}', space=vmem, size = 0x2000, scoped, tag = 'input window, operand 0, single buffered']
    #allocation5 [shape = 's32[1]{0}', space=sflag, size = 0x4, scoped, tag = 'scoped memory for tpu_custom_call.1']
    #allocation6 [shape = 's32[1]{0}', space=sflag, size = 0x4, scoped, tag = 'scoped memory for tpu_custom_call.1']
    #allocation7 [shape = 'u8[512]{0}', space=vmem, size = 0x400, scoped, tag = 'output window, operand 0, single buffered']
    %11 = vsyncpa [#allocation5], 0
    %12 = vsyncpa [#allocation6], 0
    // Predicated region
    $region2: #{tpu_custom_call.1} parent=1 // pred_check
      _
    $region3: #{tpu_custom_call.1} parent=1 // pred_check_branch
      %14 = sbr.rel (0) target = $region5
    $region4: #{tpu_custom_call.1} parent=1 // pred_region
      %16 = vsyncadd [#allocation5], 0
      %s17 = sshll.u32 %s0, 4
      %s18 = int_to_ptr.hbm [resolvable:$true] %s17
      %s19 = sshll.u32 [#allocation4], 4
      %s20 = int_to_ptr.vmem [resolvable:$true] %s19
      %25 = dma.hbm_to_vmem [thread:$0]  %s18, 256, %s20, [#allocation5], 128, 128, 8
    $region5: #{tpu_custom_call.1} parent=1 // pred_fallthru
      _
    // Predicated region
    $region6: #{tpu_custom_call.1} parent=1 // pred_check
      _
    $region7: #{tpu_custom_call.1} parent=1 // pred_check_branch
      %27 = sbr.rel (0) target = $region9
    $region8: #{tpu_custom_call.1} parent=1 // pred_region
      _
    $region9: #{tpu_custom_call.1} parent=1 // pred_fallthru
      _
    // Predicated region
    $region10: #{tpu_custom_call.1} parent=1 // pred_check
      _
    $region11: #{tpu_custom_call.1} parent=1 // pred_check_branch
      %29 = sbr.rel (0) target = $region13
    $region12: #{tpu_custom_call.1} parent=1 // pred_region
      _
    $region13: #{tpu_custom_call.1} parent=1 // pred_fallthru
      _
    // Predicated region
    $region14: #{tpu_custom_call.1} parent=1 // pred_check
      _
    $region15: #{tpu_custom_call.1} parent=1 // pred_check_branch
      %31 = sbr.rel (0) target = $region17
    $region16: #{tpu_custom_call.1} parent=1 // pred_region
      _
    $region17: #{tpu_custom_call.1} parent=1 // pred_fallthru
      _
    // Predicated region
    $region18: #{tpu_custom_call.1} parent=1 // pred_check
      _
    $region19: #{tpu_custom_call.1} parent=1 // pred_check_branch
      %33 = sbr.rel (0) target = $region21
    $region20: #{tpu_custom_call.1} parent=1 // pred_region
      %35 = dma.done [#allocation5], 256
    $region21: #{tpu_custom_call.1} parent=1 // pred_fallthru
      _
    %v36 = vld [vmem:[#allocation4] sm:$0xff]
    %v37 = vld [vmem:[#allocation4 + $0x8] sm:$0xff]
    %v38 = vld [vmem:[%s1] sm:$0x1]
    %vm39 = vcmask 261120
    %v41 = vsel %vm39, %v38, 0
    %v44 = vsel %vm39, %v36, 0
    %v47 = vsel %vm39, %v37, 0
    %49 = vmatpush.xpose.msra.mxu0 0.0
    %50 = vmatpush.xpose.msra.mxu0 0.0
    %51 = vmatpush.xpose.msra.mxu0 0.0
    %52 = vmatpush.xpose.msra.mxu0 0.0
    %53 = vmatpush.xpose.msra.mxu0 0.0
    %54 = vmatpush.xpose.msra.mxu0 0.0
    %55 = vmatpush.xpose.msra.mxu0 0.0
    %56 = vmatpush.xpose.msra.mxu0 0.0
    %57 = vmatpush.xpose.msra.mxu0 0.0
    %58 = vmatpush.xpose.msra.mxu0 0.0
    %59 = vmatpush.xpose.msra.mxu0 0.0
    %60 = vmatpush.xpose.msra.mxu0 0.0
    %61 = vmatpush.xpose.msra.mxu0 0.0
    %62 = vmatpush.xpose.msra.mxu0 0.0
    %v63 = vand.u32 %v47, 4294901760
    %64 = vmatpush.xpose.msra.mxu0 %v63
    %v65 = vand.u32 %v44, 4294901760
    %66 = vmatpush.xpose.msra.mxu0 %v65
    %v67 = vand.u32 %v41, 4294901760
    %v68 = vsub.f32 %v41, %v67
    %v69 = vand.u32 %v68, 4294901760
    %v70 = vsub.f32 %v68, %v69
    %v71 = vand.u32 %v70, 4294901760
    %72 = vmatmul.f32.gmra.mxu0 %v71
    %v73 = vpop.f32.mrf.mxu0
    %v74 = vadd.f32 0.0, %v73
    %75 = vdwg.mxu0
    %76 = vmatpush.xpose.msra.mxu0 0.0
    %77 = vmatpush.xpose.msra.mxu0 0.0
    %78 = vmatpush.xpose.msra.mxu0 0.0
    %79 = vmatpush.xpose.msra.mxu0 0.0
    %80 = vmatpush.xpose.msra.mxu0 0.0
    %81 = vmatpush.xpose.msra.mxu0 0.0
    %82 = vmatpush.xpose.msra.mxu0 0.0
    %83 = vmatpush.xpose.msra.mxu0 0.0
    %84 = vmatpush.xpose.msra.mxu0 0.0
    %85 = vmatpush.xpose.msra.mxu0 0.0
    %86 = vmatpush.xpose.msra.mxu0 0.0
    %87 = vmatpush.xpose.msra.mxu0 0.0
    %88 = vmatpush.xpose.msra.mxu0 0.0
    %89 = vmatpush.xpose.msra.mxu0 0.0
    %v90 = vand.u32 %v47, 4294901760
    %v91 = vsub.f32 %v47, %v90
    %v92 = vand.u32 %v91, 4294901760
    %v93 = vsub.f32 %v91, %v92
    %v94 = vand.u32 %v93, 4294901760
    %95 = vmatpush.xpose.msra.mxu0 %v94
    %v96 = vand.u32 %v44, 4294901760
    %v97 = vsub.f32 %v44, %v96
    %v98 = vand.u32 %v97, 4294901760
    %v99 = vsub.f32 %v97, %v98
    %v100 = vand.u32 %v99, 4294901760
    %101 = vmatpush.xpose.msra.mxu0 %v100
    %v102 = vand.u32 %v41, 4294901760
    %103 = vmatmul.f32.gmra.mxu0 %v102
    %v104 = vpop.f32.mrf.mxu0
    %v105 = vadd.f32 %v74, %v104
    %106 = vdwg.mxu0
    %107 = vmatpush.xpose.msra.mxu0 0.0
    %108 = vmatpush.xpose.msra.mxu0 0.0
    %109 = vmatpush.xpose.msra.mxu0 0.0
    %110 = vmatpush.xpose.msra.mxu0 0.0
    %111 = vmatpush.xpose.msra.mxu0 0.0
    %112 = vmatpush.xpose.msra.mxu0 0.0
    %113 = vmatpush.xpose.msra.mxu0 0.0
    %114 = vmatpush.xpose.msra.mxu0 0.0
    %115 = vmatpush.xpose.msra.mxu0 0.0
    %116 = vmatpush.xpose.msra.mxu0 0.0
    %117 = vmatpush.xpose.msra.mxu0 0.0
    %118 = vmatpush.xpose.msra.mxu0 0.0
    %119 = vmatpush.xpose.msra.mxu0 0.0
    %120 = vmatpush.xpose.msra.mxu0 0.0
    %v121 = vand.u32 %v47, 4294901760
    %v122 = vsub.f32 %v47, %v121
    %123 = vmatpush.xpose.msra.mxu0 %v122
    %v124 = vand.u32 %v44, 4294901760
    %v125 = vsub.f32 %v44, %v124
    %126 = vmatpush.xpose.msra.mxu0 %v125
    %v127 = vand.u32 %v41, 4294901760
    %v128 = vsub.f32 %v41, %v127
    %129 = vmatmul.f32.gmra.mxu0 %v128
    %v130 = vpop.f32.mrf.mxu0
    %v131 = vadd.f32 %v105, %v130
    %132 = vdwg.mxu0
    %133 = vmatpush.xpose.msra.mxu0 0.0
    %134 = vmatpush.xpose.msra.mxu0 0.0
    %135 = vmatpush.xpose.msra.mxu0 0.0
    %136 = vmatpush.xpose.msra.mxu0 0.0
    %137 = vmatpush.xpose.msra.mxu0 0.0
    %138 = vmatpush.xpose.msra.mxu0 0.0
    %139 = vmatpush.xpose.msra.mxu0 0.0
    %140 = vmatpush.xpose.msra.mxu0 0.0
    %141 = vmatpush.xpose.msra.mxu0 0.0
    %142 = vmatpush.xpose.msra.mxu0 0.0
    %143 = vmatpush.xpose.msra.mxu0 0.0
    %144 = vmatpush.xpose.msra.mxu0 0.0
    %145 = vmatpush.xpose.msra.mxu0 0.0
    %146 = vmatpush.xpose.msra.mxu0 0.0
    %v147 = vand.u32 %v47, 4294901760
    %148 = vmatpush.xpose.msra.mxu0 %v147
    %v149 = vand.u32 %v44, 4294901760
    %150 = vmatpush.xpose.msra.mxu0 %v149
    %v151 = vand.u32 %v41, 4294901760
    %v152 = vsub.f32 %v41, %v151
    %v153 = vand.u32 %v152, 4294901760
    %154 = vmatmul.f32.gmra.mxu0 %v153
    %v155 = vpop.f32.mrf.mxu0
    %v156 = vadd.f32 %v131, %v155
    %157 = vdwg.mxu0
    %158 = vmatpush.xpose.msra.mxu0 0.0
    %159 = vmatpush.xpose.msra.mxu0 0.0
    %160 = vmatpush.xpose.msra.mxu0 0.0
    %161 = vmatpush.xpose.msra.mxu0 0.0
    %162 = vmatpush.xpose.msra.mxu0 0.0
    %163 = vmatpush.xpose.msra.mxu0 0.0
    %164 = vmatpush.xpose.msra.mxu0 0.0
    %165 = vmatpush.xpose.msra.mxu0 0.0
    %166 = vmatpush.xpose.msra.mxu0 0.0
    %167 = vmatpush.xpose.msra.mxu0 0.0
    %168 = vmatpush.xpose.msra.mxu0 0.0
    %169 = vmatpush.xpose.msra.mxu0 0.0
    %170 = vmatpush.xpose.msra.mxu0 0.0
    %171 = vmatpush.xpose.msra.mxu0 0.0
    %v172 = vand.u32 %v47, 4294901760
    %v173 = vsub.f32 %v47, %v172
    %v174 = vand.u32 %v173, 4294901760
    %175 = vmatpush.xpose.msra.mxu0 %v174
    %v176 = vand.u32 %v44, 4294901760
    %v177 = vsub.f32 %v44, %v176
    %v178 = vand.u32 %v177, 4294901760
    %179 = vmatpush.xpose.msra.mxu0 %v178
    %v180 = vand.u32 %v41, 4294901760
    %181 = vmatmul.f32.gmra.mxu0 %v180
    %v182 = vpop.f32.mrf.mxu0
    %v183 = vadd.f32 %v156, %v182
    %184 = vdwg.mxu0
    %185 = vmatpush.xpose.msra.mxu0 0.0
    %186 = vmatpush.xpose.msra.mxu0 0.0
    %187 = vmatpush.xpose.msra.mxu0 0.0
    %188 = vmatpush.xpose.msra.mxu0 0.0
    %189 = vmatpush.xpose.msra.mxu0 0.0
    %190 = vmatpush.xpose.msra.mxu0 0.0
    %191 = vmatpush.xpose.msra.mxu0 0.0
    %192 = vmatpush.xpose.msra.mxu0 0.0
    %193 = vmatpush.xpose.msra.mxu0 0.0
    %194 = vmatpush.xpose.msra.mxu0 0.0
    %195 = vmatpush.xpose.msra.mxu0 0.0
    %196 = vmatpush.xpose.msra.mxu0 0.0
    %197 = vmatpush.xpose.msra.mxu0 0.0
    %198 = vmatpush.xpose.msra.mxu0 0.0
    %v199 = vand.u32 %v47, 4294901760
    %200 = vmatpush.xpose.msra.mxu0 %v199
    %v201 = vand.u32 %v44, 4294901760
    %202 = vmatpush.xpose.msra.mxu0 %v201
    %v203 = vand.u32 %v41, 4294901760
    %204 = vmatmul.f32.gmra.mxu0 %v203
    %v205 = vpop.f32.mrf.mxu0
    %v206 = vadd.f32 %v183, %v205
    %207 = vdwg.mxu0
    %s208 = sld [smem:[#allocation2]]
    %s209 = sld [smem:[#allocation3]]
    %v210 = vstv %s209
    %v211 = vsub.f32 %v206, %v210
    %v212 = vmul.f32 %v211, 1.442695
    %v213 = vpow.pop %v212
    %v214 = vstv %s208
    %v215 = vmul.f32 %v214, %v213
    %vm216 = vcmask 122880
    %217 = vst.msk [vmem:[#allocation7] sm:$0x1] %vm216, %v215
    // Predicated region
    $region22: #{tpu_custom_call.1} parent=1 // pred_check
      _
    $region23: #{tpu_custom_call.1} parent=1 // pred_check_branch
      %219 = sbr.rel (0) target = $region25
    $region24: #{tpu_custom_call.1} parent=1 // pred_region
      %221 = vsyncadd [#allocation6], 0
      %s223 = sshll.u32 [#allocation7], 4
      %s224 = int_to_ptr.vmem [resolvable:$true] %s223
      %s225 = sshll.u32 %s4, 4
      %s226 = int_to_ptr.hbm [resolvable:$true] %s225
      %228 = dma.vmem_to_hbm [thread:$0]  %s224, 16, %s226, [#allocation6]
    $region25: #{tpu_custom_call.1} parent=1 // pred_fallthru
      _
    // Predicated region
    $region26: #{tpu_custom_call.1} parent=1 // pred_check
      _
    $region27: #{tpu_custom_call.1} parent=1 // pred_check_branch
      %230 = sbr.rel (0) target = $region29
    $region28: #{tpu_custom_call.1} parent=1 // pred_region
      %232 = dma.done [#allocation6], 16
    $region29: #{tpu_custom_call.1} parent=1 // pred_fallthru
      _
    %233 = vsyncpa [#allocation5], 1
    %234 = vsyncpa [#allocation6], 1

</llo_original>
